<compile_context>
chip_gen: v7x
topology: tpu7x:2x2x1
jax: 0.10.0
libtpu: 0.0.40
codegen_flags: <defaults>
</compile_context>

<pallas_src>
import functools

import jax
import jax.numpy as jnp
from jax import lax
from jax.experimental import pallas as pl
from jax.experimental.pallas import tpu as pltpu

_LANES = 128
_SUBLANES = 8
_MAX_TILE_ROWS = 2048                    # (2048,128) f32 block = 1 MiB / input buf
_VMEM_LIMIT_BYTES = 32 * 1024 * 1024


def _round_up(a, b):
    return -(-a // b) * b


def _loss_tile(x1, x2, y, margin):
    """Elementwise margin-ranking loss on one f32 tile (pure VPU math)."""
    z = x1 - x2
    is_zero = y == 0.0                    # single compare, reused by both wheres
    z = jnp.where(is_zero, jnp.abs(z) - 1.1 * margin, z)
    yy = jnp.where(is_zero, -1.0, y)
    return jnp.maximum(-yy * z + margin, 0.0)


def _reduce_kernel(x1_ref, x2_ref, y_ref, acc_ref, *, margin, n,
                   tiles_per_core, needs_mask):
    """Accumulate per-(sublane,lane) partial sums into the (8,128) out block.

    Grid is (ncores, tiles_per_core): the leading axis is "parallel" (one
    output block per core), the trailing axis is "arbitrary" (resident
    accumulator, init on step 0).  Final cross-lane reduce happens in JAX.
    """
    t = pl.program_id(1)

    @pl.when(t == 0)
    def _init():
        acc_ref[...] = jnp.zeros_like(acc_ref)

    loss = _loss_tile(x1_ref[...].astype(jnp.float32),
                      x2_ref[...].astype(jnp.float32),
                      y_ref[...].astype(jnp.float32), margin)
    tr = loss.shape[0]

    if needs_mask:
        # Zero every element whose global index >= n: covers the <128 tail,
        # Pallas's implicit last-block padding (garbage rows) and the clamped
        # duplicate tile a core gets when the tile count is odd.
        tile = pl.program_id(0) * tiles_per_core + t      # logical, unclamped
        base = tile * (tr * _LANES)
        r = lax.broadcasted_iota(jnp.int32, (tr, _LANES), 0)
        c = lax.broadcasted_iota(jnp.int32, (tr, _LANES), 1)
        loss = jnp.where(base + r * _LANES + c < n, loss, 0.0)

    # Fold the tile down to (8,128) with VPU adds only.
    acc_ref[...] += jnp.sum(
        loss.reshape(tr // _SUBLANES, _SUBLANES, _LANES), axis=0)


def _elementwise_kernel(x1_ref, x2_ref, y_ref, out_ref, *, margin):
    """Per-element loss (reduction='none')."""
    out_ref[...] = _loss_tile(x1_ref[...].astype(jnp.float32),
                              x2_ref[...].astype(jnp.float32),
                              y_ref[...].astype(jnp.float32),
                              margin).astype(out_ref.dtype)


def margin_ranking_loss(x1, x2, y, *, margin, reduction="mean",
                        max_tile_rows=_MAX_TILE_ROWS):
    """Pallas TPU implementation of MarginRankingLoss.forward."""
    assert x1.shape == x2.shape
    assert x1.shape == y.shape
    assert x1.ndim == 1
    reduction = reduction.lower()
    if reduction not in ("mean", "sum", "none"):
        raise ValueError(f"Unknown reduction '{reduction}'")

    n = x1.shape[0]
    margin = float(margin)

    out_dtype = jnp.result_type(x1.dtype, x2.dtype)
    if not jnp.issubdtype(out_dtype, jnp.floating):
        out_dtype = jnp.float32

    if n == 0:  # match torch: empty 'none'/sum -> empty/0, mean -> nan
        if reduction == "none":
            return jnp.zeros((0,), out_dtype)
        if reduction == "sum":
            return jnp.zeros((), jnp.float32)
        return jnp.full((), jnp.nan, jnp.float32)

    rows = pl.cdiv(n, _LANES)
    # Tile rows: multiple of 16 (f32 and bf16 sublane packing), capped.
    tile_rows = min(max_tile_rows, _round_up(rows, 16))
    tile_rows = max(16, (tile_rows // 16) * 16)
    num_tiles = pl.cdiv(rows, tile_rows)

    def to2d(a, cast=None):
        if cast is not None:
            a = a.astype(cast)
        elif not jnp.issubdtype(a.dtype, jnp.floating):
            a = a.astype(jnp.float32)
        if rows * _LANES != n:
            # TODO(synk): a fully pad-free path for n % 128 != 0 needs 1-D
            # tiling of the flat array; this minimal pad only hits that case.
            a = jnp.pad(a, (0, rows * _LANES - n))
        return a.reshape(rows, _LANES)          # metadata-only when aligned

    x1p = to2d(x1)
    x2p = to2d(x2)
    yp = to2d(y, cast=jnp.bfloat16)             # labels {-1,0,1}: exact in bf16

    if reduction == "none":
        out = pl.pallas_call(
            functools.partial(_elementwise_kernel, margin=margin),
            out_shape=jax.ShapeDtypeStruct((rows, _LANES), out_dtype),
            grid=(num_tiles,),
            in_specs=[pl.BlockSpec((tile_rows, _LANES), lambda t: (t, 0))] * 3,
            out_specs=pl.BlockSpec((tile_rows, _LANES), lambda t: (t, 0)),
            compiler_params=pltpu.CompilerParams(
                dimension_semantics=("parallel",),
                vmem_limit_bytes=_VMEM_LIMIT_BYTES),
        )(x1p, x2p, yp)
        out = out.reshape(-1)
        return out if rows * _LANES == n else out[:n]

    # sum / mean: split row-tiles over 2 cores (no-op on 1-TC chips).
    ncores = 2 if num_tiles > 1 else 1
    tiles_per_core = pl.cdiv(num_tiles, ncores)
    needs_mask = ((rows * _LANES != n)
                  or (rows % tile_rows != 0)
                  or (ncores * tiles_per_core != num_tiles))

    def in_map(p, t):
        tile = p * tiles_per_core + t
        # Clamp the dead tile (odd tile count); its loss is masked to zero.
        return (jnp.minimum(tile, num_tiles - 1), 0)

    partials = pl.pallas_call(
        functools.partial(_reduce_kernel, margin=margin, n=n,
                          tiles_per_core=tiles_per_core,
                          needs_mask=needs_mask),
        out_shape=jax.ShapeDtypeStruct((ncores * _SUBLANES, _LANES),
                                       jnp.float32),
        grid=(ncores, tiles_per_core),
        in_specs=[pl.BlockSpec((tile_rows, _LANES), in_map)] * 3,
        out_specs=pl.BlockSpec((_SUBLANES, _LANES), lambda p, t: (p, 0)),
        compiler_params=pltpu.CompilerParams(
            dimension_semantics=("parallel", "arbitrary"),
            vmem_limit_bytes=_VMEM_LIMIT_BYTES),
    )(x1p, x2p, yp)

    total = jnp.sum(partials)                   # tiny cross-lane reduce in XLA
    if reduction == "mean":
        total = total / n                       # divide by true N in the wrapper
    return total


def _reference(x1, x2, y, *, margin, reduction="mean"):
    x1 = x1.astype(jnp.float32)
    x2 = x2.astype(jnp.float32)
    y = y.astype(jnp.float32)
    z = x1 - x2
    z = jnp.where(y == 0.0, jnp.abs(z) - 1.1 * margin, z)
    y = jnp.where(y == 0.0, -1.0, y)
    loss = jnp.maximum(-y * z + margin, 0.0)
    if reduction == "mean":
        return jnp.mean(loss)
    if reduction == "sum":
        return jnp.sum(loss)
    return loss


if __name__ == "__main__":
    key = jax.random.PRNGKey(0)
    k1, k2, k3 = jax.random.split(key, 3)
    MARGIN = 0.5

    def make(n, dtype=jnp.float32):
        a = jax.random.normal(k1, (n,), dtype=jnp.float32).astype(dtype)
        b = jax.random.normal(k2, (n,), dtype=jnp.float32).astype(dtype)
        lbl = jax.random.randint(k3, (n,), minval=-1, maxval=2).astype(jnp.float32)
        return a, b, lbl

    # 1) Small minibatch (typical use), all reductions.
    x1, x2, y = make(8)
    out_mean = jax.block_until_ready(
        margin_ranking_loss(x1, x2, y, margin=MARGIN, reduction="mean"))
    out_sum = jax.block_until_ready(
        margin_ranking_loss(x1, x2, y, margin=MARGIN, reduction="sum"))
    out_none = jax.block_until_ready(
        margin_ranking_loss(x1, x2, y, margin=MARGIN, reduction="none"))
    assert jnp.allclose(out_mean, _reference(x1, x2, y, margin=MARGIN), atol=1e-5, rtol=1e-4)
    assert jnp.allclose(out_sum, _reference(x1, x2, y, margin=MARGIN, reduction="sum"), atol=1e-5, rtol=1e-4)
    assert jnp.allclose(out_none, _reference(x1, x2, y, margin=MARGIN, reduction="none"), atol=1e-5, rtol=1e-4)

    # 2) Aligned (n % 128 == 0, no pad), multi-tile, 2-way core split, no mask.
    a1, a2, ay = make(64 * 128)
    out2 = jax.block_until_ready(
        margin_ranking_loss(a1, a2, ay, margin=MARGIN, reduction="mean", max_tile_rows=16))
    assert jnp.allclose(out2, _reference(a1, a2, ay, margin=MARGIN), atol=1e-5, rtol=1e-4)

    # 3) Unaligned tail + odd tile count (clamped dead tile + in-kernel mask).
    b1, b2, by = make(5 * 16 * 128 - 37)
    out3m = jax.block_until_ready(
        margin_ranking_loss(b1, b2, by, margin=MARGIN, reduction="mean", max_tile_rows=16))
    out3n = jax.block_until_ready(
        margin_ranking_loss(b1, b2, by, margin=MARGIN, reduction="none", max_tile_rows=16))
    assert jnp.allclose(out3m, _reference(b1, b2, by, margin=MARGIN), atol=1e-5, rtol=1e-4)
    assert jnp.allclose(out3n, _reference(b1, b2, by, margin=MARGIN, reduction="none"),
                        atol=1e-5, rtol=1e-4)

    # 4) bf16 inputs: 'none' output follows the input dtype.
    c1, c2, cy = make(2000, dtype=jnp.bfloat16)
    out4 = jax.block_until_ready(
        margin_ranking_loss(c1, c2, cy, margin=MARGIN, reduction="none"))
    assert out4.dtype == jnp.bfloat16
    assert jnp.allclose(out4.astype(jnp.float32),
                        _reference(c1, c2, cy, margin=MARGIN, reduction="none"),
                        atol=2e-2, rtol=2e-2)

    print("KERNEL_OK")
</pallas_src>

<mosaic_0001>
module attributes {stable_mosaic.version = 11 : i64} {
  func.func @_reduce_kernel(%arg0: i32, %arg1: i32, %arg2: memref<16x128xf32, #tpu.memory_space<vmem>>, %arg3: memref<16x128xf32, #tpu.memory_space<vmem>>, %arg4: memref<16x128xbf16, #tpu.memory_space<vmem>>, %arg5: memref<8x128xf32, #tpu.memory_space<vmem>>) attributes {dimension_semantics = [#tpu.dimension_semantics<parallel>, #tpu.dimension_semantics<arbitrary>], iteration_bounds = array<i64: 1, 1>, scalar_prefetch = 0 : i64, scratch_operands = 0 : i64, tpu.core_type = #tpu.core_type<tc>, window_params = [{transform_indices = @transform_0, window_bounds = array<i64: 16, 128>}, {transform_indices = @transform_1, window_bounds = array<i64: 16, 128>}, {transform_indices = @transform_2, window_bounds = array<i64: 16, 128>}, {transform_indices = @transform_3, window_bounds = array<i64: 8, 128>}]} {
    %c0_i32 = arith.constant 0 : i32
    %0 = arith.cmpi eq, %arg1, %c0_i32 : i32
    %1 = arith.extui %0 : i1 to i32
    %c0_i32_0 = arith.constant 0 : i32
    %2 = arith.cmpi ne, %1, %c0_i32_0 : i32
    scf.if %2 {
      %cst_17 = arith.constant 0.000000e+00 : f32
      %42 = vector.broadcast %cst_17 : f32 to vector<8x128xf32>
      %c0_18 = arith.constant 0 : index
      %c0_19 = arith.constant 0 : index
      %43 = vector.load %arg5[%c0_18, %c0_19] : memref<8x128xf32, #tpu.memory_space<vmem>>, vector<8x128xf32>
      tpu.vector_store %arg5[%c0_18, %c0_19], %42 {strides = array<i32>} : memref<8x128xf32, #tpu.memory_space<vmem>>, vector<8x128xf32>,
    } else {
    }
    %c0 = arith.constant 0 : index
    %c0_1 = arith.constant 0 : index
    %3 = vector.load %arg2[%c0, %c0_1] : memref<16x128xf32, #tpu.memory_space<vmem>>, vector<16x128xf32>
    %c0_2 = arith.constant 0 : index
    %c0_3 = arith.constant 0 : index
    %4 = vector.load %arg3[%c0_2, %c0_3] : memref<16x128xf32, #tpu.memory_space<vmem>>, vector<16x128xf32>
    %c0_4 = arith.constant 0 : index
    %c0_5 = arith.constant 0 : index
    %5 = vector.load %arg4[%c0_4, %c0_5] : memref<16x128xbf16, #tpu.memory_space<vmem>>, vector<16x128xbf16>
    %6 = arith.extf %5 : vector<16x128xbf16> to vector<16x128xf32>
    %7 = arith.subf %3, %4 : vector<16x128xf32>
    %cst = arith.constant 0.000000e+00 : f32
    %8 = vector.broadcast %cst : f32 to vector<16x128xf32>
    %9 = arith.cmpf oeq, %6, %8 : vector<16x128xf32>
    %10 = math.absf %7 : vector<16x128xf32>
    %cst_6 = arith.constant 5.500000e-01 : f32
    %11 = vector.broadcast %cst_6 : f32 to vector<16x128xf32>
    %12 = arith.subf %10, %11 : vector<16x128xf32>
    %13 = arith.select %9, %12, %7 : vector<16x128xi1>, vector<16x128xf32>
    %cst_7 = arith.constant -1.000000e+00 : f32
    %14 = vector.broadcast %cst_7 : f32 to vector<16x128xf32>
    %15 = arith.select %9, %14, %6 : vector<16x128xi1>, vector<16x128xf32>
    %cst_8 = arith.constant 0.000000e+00 : f32
    %16 = vector.broadcast %cst_8 : f32 to vector<16x128xf32>
    %17 = arith.subf %16, %15 : vector<16x128xf32>
    %18 = arith.mulf %17, %13 : vector<16x128xf32>
    %cst_9 = arith.constant 5.000000e-01 : f32
    %19 = vector.broadcast %cst_9 : f32 to vector<16x128xf32>
    %20 = arith.addf %18, %19 : vector<16x128xf32>
    %cst_10 = arith.constant 0.000000e+00 : f32
    %21 = vector.broadcast %cst_10 : f32 to vector<16x128xf32>
    %22 = arith.maximumf %20, %21 : vector<16x128xf32>
    %c1_i32 = arith.constant 1 : i32
    %23 = arith.muli %arg0, %c1_i32 : i32
    %24 = arith.addi %23, %arg1 : i32
    %c2048_i32 = arith.constant 2048 : i32
    %25 = arith.muli %24, %c2048_i32 : i32
    %26 = tpu.iota {dimensions = array<i32: 0>} : vector<16x128xi32>
    %27 = tpu.iota {dimensions = array<i32: 1>} : vector<16x128xi32>
    %c128_i32 = arith.constant 128 : i32
    %28 = vector.broadcast %c128_i32 : i32 to vector<16x128xi32>
    %29 = arith.muli %26, %28 : vector<16x128xi32>
    %30 = vector.broadcast %25 : i32 to vector<16x128xi32>
    %31 = arith.addi %30, %29 : vector<16x128xi32>
    %32 = arith.addi %31, %27 : vector<16x128xi32>
    %c8_i32 = arith.constant 8 : i32
    %33 = vector.broadcast %c8_i32 : i32 to vector<16x128xi32>
    %34 = arith.cmpi slt, %32, %33 : vector<16x128xi32>
    %cst_11 = arith.constant 0.000000e+00 : f32
    %35 = vector.broadcast %cst_11 : f32 to vector<16x128xf32>
    %36 = arith.select %34, %22, %35 : vector<16x128xi1>, vector<16x128xf32>
    %c0_12 = arith.constant 0 : index
    %c0_13 = arith.constant 0 : index
    %37 = vector.load %arg5[%c0_12, %c0_13] : memref<8x128xf32, #tpu.memory_space<vmem>>, vector<8x128xf32>
    %38 = vector.shape_cast %36 : vector<16x128xf32> to vector<2x8x128xf32>
    %cst_14 = arith.constant dense<0.000000e+00> : vector<8x128xf32>
    %39 = vector.multi_reduction <add>, %38, %cst_14 [0] : vector<2x8x128xf32> to vector<8x128xf32>
    %40 = arith.addf %37, %39 : vector<8x128xf32>
    %c0_15 = arith.constant 0 : index
    %c0_16 = arith.constant 0 : index
    %41 = vector.load %arg5[%c0_15, %c0_16] : memref<8x128xf32, #tpu.memory_space<vmem>>, vector<8x128xf32>
    tpu.vector_store %arg5[%c0_15, %c0_16], %40 {strides = array<i32>} : memref<8x128xf32, #tpu.memory_space<vmem>>, vector<8x128xf32>,
    return
  }
  func.func @transform_0(%arg0: i32, %arg1: i32) -> (i32, i32) {
    %c1_i32 = arith.constant 1 : i32
    %0 = arith.muli %arg0, %c1_i32 : i32
    %1 = arith.addi %0, %arg1 : i32
    %c0_i32 = arith.constant 0 : i32
    %2 = arith.minsi %1, %c0_i32 : i32
    %c0_i32_0 = arith.constant 0 : i32
    %c0_i32_1 = arith.constant 0 : i32
    return %2, %c0_i32_0 : i32, i32
  }
  func.func @transform_1(%arg0: i32, %arg1: i32) -> (i32, i32) {
    %c1_i32 = arith.constant 1 : i32
    %0 = arith.muli %arg0, %c1_i32 : i32
    %1 = arith.addi %0, %arg1 : i32
    %c0_i32 = arith.constant 0 : i32
    %2 = arith.minsi %1, %c0_i32 : i32
    %c0_i32_0 = arith.constant 0 : i32
    %c0_i32_1 = arith.constant 0 : i32
    return %2, %c0_i32_0 : i32, i32
  }
  func.func @transform_2(%arg0: i32, %arg1: i32) -> (i32, i32) {
    %c1_i32 = arith.constant 1 : i32
    %0 = arith.muli %arg0, %c1_i32 : i32
    %1 = arith.addi %0, %arg1 : i32
    %c0_i32 = arith.constant 0 : i32
    %2 = arith.minsi %1, %c0_i32 : i32
    %c0_i32_0 = arith.constant 0 : i32
    %c0_i32_1 = arith.constant 0 : i32
    return %2, %c0_i32_0 : i32, i32
  }
  func.func @transform_3(%arg0: i32, %arg1: i32) -> (i32, i32) {
    %c0_i32 = arith.constant 0 : i32
    %c0_i32_0 = arith.constant 0 : i32
    return %arg0, %c0_i32 : i32, i32
  }
}

</mosaic_0001>

<llo_original>
// kernel: tpu_custom_call.1
$region0: #{tpu_custom_call.1}
  #allocation0 [shape = 'u32[]', space=smem, size = 0x4, offset = 0x4, fixed_abs, tag = 'smem constant byte address 0x4 - core index']
  #allocation1 [shape = 'u32[144,128]{1,0:T(1,128)}', space=vmem, size = 0x12000, scoped, tag = 'internal scratch']
  %s0 = inlined_call_operand.hbm [shape: f32[1,128], index: 0, kind: input, shape index: {}]
  %s1 = inlined_call_operand.vmem [shape: f32[1,128], index: 1, kind: input, shape index: {}]
  %s2 = inlined_call_operand.vmem [shape: bf16[1,128], index: 2, kind: input, shape index: {}]
  %s3 = inlined_call_operand.hbm [shape: f32[8,128], index: 3, kind: output, shape index: {}]
  %s4 = sld [smem:[#allocation0]]
  $region30: #{tpu_custom_call.1} parent=0
    _
  %s6 = ssub.s32 1, %s4
  %s7 = scalar_select 0, %s6, %s4
  $region1: #{tpu_custom_call.1} parent=0
    #allocation2 [shape = 'u8[8192]{0}', space=vmem, size = 0x2000, scoped, tag = 'input window, operand 0, single buffered']
    #allocation3 [shape = 's32[1]{0}', space=sflag, size = 0x4, scoped, tag = 'scoped memory for tpu_custom_call.1']
    #allocation4 [shape = 's32[1]{0}', space=sflag, size = 0x4, scoped, tag = 'scoped memory for tpu_custom_call.1']
    #allocation5 [shape = 'u8[4096]{0}', space=vmem, size = 0x1000, scoped, tag = 'output window, operand 0, single buffered']
    %8 = vsyncpa [#allocation3], 0
    %9 = vsyncpa [#allocation4], 0
    // Predicated region
    $region2: #{tpu_custom_call.1} parent=1 // pred_check
      _
    $region3: #{tpu_custom_call.1} parent=1 // pred_check_branch
      %11 = sbr.rel (0) target = $region5
    $region4: #{tpu_custom_call.1} parent=1 // pred_region
      %s12 = sadd.s32 0, 0
      %p13 = scmp.lt.s32.totalorder %s12, 0
      %s14 = scalar_select %p13, %s12, 0
      %s15 = smul.u32 16, %s14
      %s16 = ssub.s32 1, %s15
      %s17 = smul.u32 16, %s16
      %s19 = ssub.s32 256, %s17
      %20 = vsyncadd [#allocation3], %s19
      %p21 = scmp.ne.s32.totalorder 0, %s17
      %s22 = smul.addr %s15, 16
      %s23 = scalar_lea.hbm %s0, %s22
      %s24 = sshll.u32 [#allocation2], 4
      %s25 = int_to_ptr.vmem [resolvable:$true] %s24
      %s26 = sshll.u32 %s16, 4
      %30 = dma.hbm_to_vmem [thread:$0]  (%p21), %s23, %s26, %s25, [#allocation3], 16, 16, 1
    $region5: #{tpu_custom_call.1} parent=1 // pred_fallthru
      _
    // Predicated region
    $region6: #{tpu_custom_call.1} parent=1 // pred_check
      _
    $region7: #{tpu_custom_call.1} parent=1 // pred_check_branch
      %32 = sbr.rel (0) target = $region9
    $region8: #{tpu_custom_call.1} parent=1 // pred_region
      %s33 = sadd.s32 0, 0
      %p34 = scmp.lt.s32.totalorder %s33, 0
      %s35 = scalar_select %p34, %s33, 0
      %s36 = smul.u32 16, %s35
      %s37 = ssub.s32 1, %s36
      %s38 = smul.u32 16, %s37
      %p39 = scmp.lt.s32.totalorder %s36, 0
      %s40 = scalar_select %p39, %s36, 0
      %s41 = scalar_lea.vmem %s1, %s40
      %s42 = sadd.s32 0, 0
      %p43 = scmp.lt.s32.totalorder %s42, 0
      %s44 = scalar_select %p43, %s42, 0
      %s45 = smul.u32 16, %s44
      %s46 = ssub.s32 1, %s45
      %s47 = smul.u32 16, %s46
    $region9: #{tpu_custom_call.1} parent=1 // pred_fallthru
      _
    // Predicated region
    $region10: #{tpu_custom_call.1} parent=1 // pred_check
      _
    $region11: #{tpu_custom_call.1} parent=1 // pred_check_branch
      %49 = sbr.rel (0) target = $region13
    $region12: #{tpu_custom_call.1} parent=1 // pred_region
      %s50 = sadd.s32 0, 0
      %p51 = scmp.lt.s32.totalorder %s50, 0
      %s52 = scalar_select %p51, %s50, 0
      %s53 = smul.u32 8, %s52
      %s54 = ssub.s32 1, %s53
      %s55 = smul.u32 16, %s54
      %p56 = scmp.lt.s32.totalorder %s53, 0
      %s57 = scalar_select %p56, %s53, 0
      %s58 = scalar_lea.vmem %s2, %s57
      %s59 = sadd.s32 0, 0
      %p60 = scmp.lt.s32.totalorder %s59, 0
      %s61 = scalar_select %p60, %s59, 0
      %s62 = smul.u32 8, %s61
      %s63 = ssub.s32 1, %s62
      %s64 = smul.u32 16, %s63
    $region13: #{tpu_custom_call.1} parent=1 // pred_fallthru
      _
    // Predicated region
    $region14: #{tpu_custom_call.1} parent=1 // pred_check
      _
    $region15: #{tpu_custom_call.1} parent=1 // pred_check_branch
      %66 = sbr.rel (0) target = $region17
    $region16: #{tpu_custom_call.1} parent=1 // pred_region
      %67 = dma.done [#allocation3], 256
    $region17: #{tpu_custom_call.1} parent=1 // pred_fallthru
      _
    %s68 = sadd.s32 0, 0
    %p69 = scmp.lt.s32.totalorder %s68, 0
    %s70 = scalar_select %p69, %s68, 0
    %s71 = smul.u32 16, %s70
    %s72 = ssub.s32 1, %s71
    %s73 = smul.u32 16, %s72
    %p74 = scmp.lt.s32.totalorder %s71, 0
    %s75 = scalar_select %p74, %s71, 0
    %s76 = scalar_lea.vmem %s1, %s75
    %s77 = sadd.s32 0, 0
    %p78 = scmp.lt.s32.totalorder %s77, 0
    %s79 = scalar_select %p78, %s77, 0
    %s80 = smul.u32 8, %s79
    %s81 = ssub.s32 1, %s80
    %s82 = smul.u32 16, %s81
    %p83 = scmp.lt.s32.totalorder %s80, 0
    %s84 = scalar_select %p83, %s80, 0
    %s85 = scalar_lea.vmem %s2, %s84
    %s86 = sadd.s32 0, 0
    %p87 = scmp.lt.s32.totalorder %s86, 0
    %s88 = scalar_select %p87, %s86, 0
    %s89 = smul.u32 16, %s88
    %s90 = ssub.s32 1, %s89
    %s91 = smul.u32 16, %s90
    %s92 = sadd.s32 0, 0
    %p93 = scmp.lt.s32.totalorder %s92, 0
    %s94 = scalar_select %p93, %s92, 0
    %s95 = smul.u32 16, %s94
    %s96 = ssub.s32 1, %s95
    %s97 = smul.u32 16, %s96
    %p98 = scmp.lt.s32.totalorder %s95, 0
    %s99 = scalar_select %p98, %s95, 0
    %s100 = scalar_lea.vmem %s1, %s99
    %s101 = sadd.s32 0, 0
    %p102 = scmp.lt.s32.totalorder %s101, 0
    %s103 = scalar_select %p102, %s101, 0
    %s104 = smul.u32 16, %s103
    %s105 = ssub.s32 1, %s104
    %s106 = smul.u32 16, %s105
    %s107 = sadd.s32 0, 0
    %p108 = scmp.lt.s32.totalorder %s107, 0
    %s109 = scalar_select %p108, %s107, 0
    %s110 = smul.u32 8, %s109
    %s111 = ssub.s32 1, %s110
    %s112 = smul.u32 16, %s111
    %p113 = scmp.lt.s32.totalorder %s110, 0
    %s114 = scalar_select %p113, %s110, 0
    %s115 = scalar_lea.vmem %s2, %s114
    %s116 = sadd.s32 0, 0
    %p117 = scmp.lt.s32.totalorder %s116, 0
    %s118 = scalar_select %p117, %s116, 0
    %s119 = smul.u32 8, %s118
    %s120 = ssub.s32 1, %s119
    %s121 = smul.u32 16, %s120
    %p122 = scmp.eq.s32.totalorder 0, 0
    // Predicated region
    $region18: #{tpu_custom_call.1} parent=1 // pred_check
      %p123 = pneg %p122
    $region19: #{tpu_custom_call.1} parent=1 // pred_check_branch
      %125 = sbr.rel (%p123) target = $region21
    $region20: #{tpu_custom_call.1} parent=1 // pred_region
      %126 = vst [vmem:[#allocation5] sm:$0xff] 0.0
    $region21: #{tpu_custom_call.1} parent=1 // pred_fallthru
      _
    %v127 = vld [vmem:[#allocation2] sm:$0xff]
    %v128 = vld [vmem:[#allocation2 + $0x8] sm:$0xff]
    %v129 = vld [vmem:[%s100] sm:$0xff]
    %v130 = vld [vmem:[%s100 + $0x8] sm:$0xff]
    %v131 = vld [vmem:[%s115] sm:$0x1]
    %v132 = vld [vmem:[%s115 + $0x1] sm:$0x1]
    %v133 = vld [vmem:[%s115 + $0x2] sm:$0x1]
    %v134 = vld [vmem:[%s115 + $0x3] sm:$0x1]
    %v135 = vld [vmem:[%s115 + $0x4] sm:$0x1]
    %v136 = vld [vmem:[%s115 + $0x5] sm:$0x1]
    %v137 = vld [vmem:[%s115 + $0x6] sm:$0x1]
    %v138 = vld [vmem:[%s115 + $0x7] sm:$0x1]
    %v139 = vunpack.c.l.bf16 %v131
    %v140 = vunpack.c.l.bf16 %v132
    %v141 = vunpack.c.l.bf16 %v133
    %v142 = vunpack.c.l.bf16 %v134
    %v143 = vunpack.c.l.bf16 %v135
    %v144 = vunpack.c.l.bf16 %v136
    %v145 = vunpack.c.l.bf16 %v137
    %v146 = vunpack.c.l.bf16 %v138
    %v147 = vsub.f32 %v127, %v129
    %v148 = vsub.f32 %v128, %v130
    %vm149 = vcmp.eq.f32.partialorder %v139, 0.0
    %vm150 = vcmp.eq.f32.partialorder %v140, 0.0
    %vm151 = vcmp.eq.f32.partialorder %v141, 0.0
    %vm152 = vcmp.eq.f32.partialorder %v142, 0.0
    %vm153 = vcmp.eq.f32.partialorder %v143, 0.0
    %vm154 = vcmp.eq.f32.partialorder %v144, 0.0
    %vm155 = vcmp.eq.f32.partialorder %v145, 0.0
    %vm156 = vcmp.eq.f32.partialorder %v146, 0.0
    %v157 = vand.u32 2147483647, %v147
    %v158 = vand.u32 2147483647, %v148
    %v159 = vsub.f32 %v157, 0.55
    %v160 = vsub.f32 %v158, 0.55
    %v163 = vcombine.high %v159, %v159
    %v165 = vunpack.c.l.s4 1983009808
    %v166 = vunpack.c.0.s8 %v165
    %v167 = vlaneseq
    %v168 = vshrl.u32 %v167, 7
    %v169 = vsub.s32 %v166, %v168
    %v170 = vrot.slane %v159, %v169
    %v172 = vunpack.c.l.s4 1983009808
    %v173 = vunpack.c.0.s8 %v172
    %v174 = vlaneseq
    %v175 = vshrl.u32 %v174, 7
    %v176 = vsub.s32 %v173, %v175
    %v177 = vrot.slane %v163, %v176
    %v178 = vcombine.high %v170, %v170
    %v179 = vcombine.high %v177, %v177
    %v180 = vcombine.high %v160, %v160
    %v182 = vunpack.c.l.s4 1983009808
    %v183 = vunpack.c.0.s8 %v182
    %v184 = vlaneseq
    %v185 = vshrl.u32 %v184, 7
    %v186 = vsub.s32 %v183, %v185
    %v187 = vrot.slane %v160, %v186
    %v189 = vunpack.c.l.s4 1983009808
    %v190 = vunpack.c.0.s8 %v189
    %v191 = vlaneseq
    %v192 = vshrl.u32 %v191, 7
    %v193 = vsub.s32 %v190, %v192
    %v194 = vrot.slane %v180, %v193
    %v195 = vcombine.high %v187, %v187
    %v196 = vcombine.high %v194, %v194
    %v207 = vcombine.high %v147, %v147
    %v209 = vunpack.c.l.s4 1983009808
    %v210 = vunpack.c.0.s8 %v209
    %v211 = vlaneseq
    %v212 = vshrl.u32 %v211, 7
    %v213 = vsub.s32 %v210, %v212
    %v214 = vrot.slane %v147, %v213
    %v216 = vunpack.c.l.s4 1983009808
    %v217 = vunpack.c.0.s8 %v216
    %v218 = vlaneseq
    %v219 = vshrl.u32 %v218, 7
    %v220 = vsub.s32 %v217, %v219
    %v221 = vrot.slane %v207, %v220
    %v222 = vcombine.high %v214, %v214
    %v223 = vcombine.high %v221, %v221
    %v224 = vcombine.high %v148, %v148
    %v226 = vunpack.c.l.s4 1983009808
    %v227 = vunpack.c.0.s8 %v226
    %v228 = vlaneseq
    %v229 = vshrl.u32 %v228, 7
    %v230 = vsub.s32 %v227, %v229
    %v231 = vrot.slane %v148, %v230
    %v233 = vunpack.c.l.s4 1983009808
    %v234 = vunpack.c.0.s8 %v233
    %v235 = vlaneseq
    %v236 = vshrl.u32 %v235, 7
    %v237 = vsub.s32 %v234, %v236
    %v238 = vrot.slane %v224, %v237
    %v239 = vcombine.high %v231, %v231
    %v240 = vcombine.high %v238, %v238
    %v249 = vsel %vm149, %v170, %v214
    %v250 = vsel %vm150, %v178, %v222
    %v251 = vsel %vm151, %v177, %v221
    %v252 = vsel %vm152, %v179, %v223
    %v253 = vsel %vm153, %v187, %v231
    %v254 = vsel %vm154, %v195, %v239
    %v255 = vsel %vm155, %v194, %v238
    %v256 = vsel %vm156, %v196, %v240
    %v257 = vsel %vm149, -1.0, %v139
    %v258 = vsel %vm150, -1.0, %v140
    %v259 = vsel %vm151, -1.0, %v141
    %v260 = vsel %vm152, -1.0, %v142
    %v261 = vsel %vm153, -1.0, %v143
    %v262 = vsel %vm154, -1.0, %v144
    %v263 = vsel %vm155, -1.0, %v145
    %v264 = vsel %vm156, -1.0, %v146
    %v265 = vsub.f32 0.0, %v257
    %v266 = vsub.f32 0.0, %v258
    %v267 = vsub.f32 0.0, %v259
    %v268 = vsub.f32 0.0, %v260
    %v269 = vsub.f32 0.0, %v261
    %v270 = vsub.f32 0.0, %v262
    %v271 = vsub.f32 0.0, %v263
    %v272 = vsub.f32 0.0, %v264
    %v273 = vmul.f32 %v265, %v249
    %v274 = vmul.f32 %v266, %v250
    %v275 = vmul.f32 %v267, %v251
    %v276 = vmul.f32 %v268, %v252
    %v277 = vmul.f32 %v269, %v253
    %v278 = vmul.f32 %v270, %v254
    %v279 = vmul.f32 %v271, %v255
    %v280 = vmul.f32 %v272, %v256
    %v281 = vadd.f32 %v273, 0.5
    %v282 = vadd.f32 %v274, 0.5
    %v283 = vadd.f32 %v275, 0.5
    %v284 = vadd.f32 %v276, 0.5
    %v285 = vadd.f32 %v277, 0.5
    %v286 = vadd.f32 %v278, 0.5
    %v287 = vadd.f32 %v279, 0.5
    %v288 = vadd.f32 %v280, 0.5
    %v289 = vmax.f32 %v281, 0.0
    %v290 = vmax.f32 %v282, 0.0
    %v291 = vmax.f32 %v283, 0.0
    %v292 = vmax.f32 %v284, 0.0
    %v293 = vmax.f32 %v285, 0.0
    %v294 = vmax.f32 %v286, 0.0
    %v295 = vmax.f32 %v287, 0.0
    %v296 = vmax.f32 %v288, 0.0
    %s297 = sadd.s32 0, 0
    %s298 = smul.u32 %s297, 2048
    %v299 = vlaneseq
    %v300 = vshrl.u32 %v299, 7
    %v301 = vadd.s32 %v300, 8
    %v302 = vlaneseq
    %v303 = vand.u32 %v302, 127
    %v304 = vmul.u32 %v300, 128
    %v305 = vmul.u32 %v301, 128
    %v306 = vstv %s298
    %v307 = vadd.s32 %v306, %v304
    %v308 = vadd.s32 %v306, %v305
    %v309 = vadd.s32 %v307, %v303
    %v310 = vadd.s32 %v308, %v303
    %vm311 = vcmp.lt.s32.totalorder %v309, 8
    %vm312 = vcmp.lt.s32.totalorder %v310, 8
    %v321 = vcombine.low %v289, %v290
    %v322 = vcombine.low %v291, %v292
    %v324 = vunpack.c.l.s4 1983009808
    %v325 = vunpack.c.0.s8 %v324
    %v326 = vlaneseq
    %v327 = vshrl.u32 %v326, 7
    %v328 = vsub.s32 %v325, %v327
    %v329 = vrot.slane %v321, %v328
    %v331 = vunpack.c.l.s4 1983009808
    %v332 = vunpack.c.0.s8 %v331
    %v333 = vlaneseq
    %v334 = vshrl.u32 %v333, 7
    %v335 = vsub.s32 %v332, %v334
    %v336 = vrot.slane %v322, %v335
    %v337 = vcombine.low %v329, %v336
    %v338 = vcombine.low %v293, %v294
    %v339 = vcombine.low %v295, %v296
    %v341 = vunpack.c.l.s4 1983009808
    %v342 = vunpack.c.0.s8 %v341
    %v343 = vlaneseq
    %v344 = vshrl.u32 %v343, 7
    %v345 = vsub.s32 %v342, %v344
    %v346 = vrot.slane %v338, %v345
    %v348 = vunpack.c.l.s4 1983009808
    %v349 = vunpack.c.0.s8 %v348
    %v350 = vlaneseq
    %v351 = vshrl.u32 %v350, 7
    %v352 = vsub.s32 %v349, %v351
    %v353 = vrot.slane %v339, %v352
    %v354 = vcombine.low %v346, %v353
    %v357 = vsel %vm311, %v337, 0.0
    %v358 = vsel %vm312, %v354, 0.0
    %v359 = vld [vmem:[#allocation5] sm:$0xff]
    %v360 = vadd.f32 %v357, %v358
    %v361 = vadd.f32 %v359, %v360
    %362 = vst [vmem:[#allocation5] sm:$0xff] %v361
    // Predicated region
    $region22: #{tpu_custom_call.1} parent=1 // pred_check
      _
    $region23: #{tpu_custom_call.1} parent=1 // pred_check_branch
      %364 = sbr.rel (0) target = $region25
    $region24: #{tpu_custom_call.1} parent=1 // pred_region
      %s366 = ssub.s32 128, 128
      %367 = vsyncadd [#allocation4], %s366
      %s369 = sshll.u32 [#allocation5], 4
      %s370 = int_to_ptr.vmem [resolvable:$true] %s369
      %372 = dma.vmem_to_hbm [thread:$0]  %s370, 128, %s3, [#allocation4]
    $region25: #{tpu_custom_call.1} parent=1 // pred_fallthru
      _
    // Predicated region
    $region26: #{tpu_custom_call.1} parent=1 // pred_check
      _
    $region27: #{tpu_custom_call.1} parent=1 // pred_check_branch
      %374 = sbr.rel (0) target = $region29
    $region28: #{tpu_custom_call.1} parent=1 // pred_region
      %375 = dma.done [#allocation4], 128
    $region29: #{tpu_custom_call.1} parent=1 // pred_fallthru
      _
    %376 = vsyncpa [#allocation3], 1
    %377 = vsyncpa [#allocation4], 1

</llo_original>
